<compile_context>
chip_gen: v6e
topology: v6e:2x2x1
jax: 0.10.0
libtpu: 0.0.40
codegen_flags: <defaults>
</compile_context>

<pallas_src>
import functools
from math import sqrt

import jax
import jax.numpy as jnp
from jax.experimental import pallas as pl
from jax.experimental.pallas import tpu as pltpu

_MASK_VALUE = -0.7 * float(jnp.finfo(jnp.float32).max)


def _flash_attention_kernel(q_ref, k_ref, v_ref, *rest, scale, causal, has_mask):
    if has_mask:
        m_ref, o_ref, m_scr, l_scr, acc_scr = rest
    else:
        m_ref = None
        o_ref, m_scr, l_scr, acc_scr = rest

    block_q = q_ref.shape[2]
    block_k = k_ref.shape[2]
    qi = pl.program_id(2)
    ki = pl.program_id(3)
    nk = pl.num_programs(3)

    @pl.when(ki == 0)
    def _init():
        m_scr[...] = jnp.full_like(m_scr, _MASK_VALUE)
        l_scr[...] = jnp.zeros_like(l_scr)
        acc_scr[...] = jnp.zeros_like(acc_scr)

    def _update():
        # Native-dtype operands into the MXU; fold the softmax scale into q
        # (touches block_q*E elements instead of block_q*block_k scores).
        q = q_ref[0, 0] * scale                          # (block_q, E)
        k = k_ref[0, 0]                                  # (block_k, E)
        v = v_ref[0, 0]                                  # (block_k, D)

        scores = jax.lax.dot_general(                    # (block_q, block_k) f32
            q, k, (((1,), (1,)), ((), ())),
            preferred_element_type=jnp.float32)

        if causal:
            row = qi * block_q + jax.lax.broadcasted_iota(
                jnp.int32, (block_q, block_k), 0)
            col = ki * block_k + jax.lax.broadcasted_iota(
                jnp.int32, (block_q, block_k), 1)
            scores = jnp.where(col > row, _MASK_VALUE, scores)
        elif has_mask:
            # Convention: nonzero / True => masked out (additive float masks
            # are not supported).
            mask = m_ref[0, 0].astype(jnp.int32)
            scores = jnp.where(mask != 0, _MASK_VALUE, scores)

        m_prev = m_scr[...]
        m_new = jnp.maximum(m_prev, jnp.max(scores, axis=-1, keepdims=True))
        alpha = jnp.exp(m_prev - m_new)
        p = jnp.exp(scores - m_new)
        l_scr[...] = alpha * l_scr[...] + jnp.sum(p, axis=-1, keepdims=True)
        acc_scr[...] = alpha * acc_scr[...] + jax.lax.dot_general(
            p.astype(v.dtype), v, (((1,), (0,)), ((), ())),
            preferred_element_type=jnp.float32)
        m_scr[...] = m_new

    if causal:
        # Skip kv blocks that lie entirely above the diagonal of this q block.
        @pl.when(ki * block_k <= qi * block_q + (block_q - 1))
        def _():
            _update()
    else:
        _update()

    @pl.when(ki == nk - 1)
    def _finalize():
        l = l_scr[...]
        inv_l = pl.reciprocal(l, approx=True)            # EUP seed ...
        inv_l = inv_l * (2.0 - l * inv_l)                # ... + 1 NR step (f32 accuracy)
        o_ref[0, 0] = (acc_scr[...] * inv_l).astype(o_ref.dtype)


def _pick_block(dim, preferred):
    """Largest MXU/lane-friendly tile that divides `dim` (falls back to full)."""
    if dim <= preferred:
        return dim
    for cand in (preferred, preferred // 2, 128):
        if cand >= 8 and dim % cand == 0:
            return cand
    # TODO(synk): pad / ragged tiling for sequence lengths not divisible by 128.
    return dim


def full_attention(queries, keys, values, attn_mask=None, *,
                   mask_flag=True, scale=None, output_attention=False,
                   block_q=None, block_k=None):
    """Pallas TPU implementation of FullAttention.forward.

    queries: (B, L, H, E), keys: (B, S, H, E), values: (B, S, H, D)
    attn_mask: optional (B, 1 or H, L, S); nonzero/True => masked (-> -inf).
    Returns (V, None) with V of shape (B, L, H, D).
    """
    B, L, H, E = queries.shape
    _, S, _, D = values.shape
    scale = float(scale) if scale is not None else 1.0 / sqrt(E)

    # TODO(synk): the reference TriangularCasualMask is malformed (a `def`, and
    # tril(diagonal=1) would NaN-out the last rows); the default path here uses
    # the intended standard causal mask (key position > query position masked)
    # generated in-kernel, with masked logits set to a large finite negative
    # instead of -inf (required for tile-wise online softmax).
    causal = bool(mask_flag) and attn_mask is None
    has_mask = bool(mask_flag) and attn_mask is not None

    # --- tile sizing (generation-aware) ------------------------------------
    itemsize = jnp.dtype(queries.dtype).itemsize
    preferred = 512 if itemsize <= 2 else 256            # bf16 vs f32 tiles
    try:
        vmem_cap = int(pltpu.get_tpu_info().vmem_capacity_bytes)
    except Exception:
        vmem_cap = 128 * 1024 * 1024
    if vmem_cap <= 64 * 1024 * 1024:                     # v7x: half the VMEM
        preferred = min(preferred, 256)
        vmem_limit = 32 * 1024 * 1024
    else:                                                # v5e / v6e
        vmem_limit = 64 * 1024 * 1024

    if block_q is None:
        block_q = _pick_block(L, preferred)
    if block_k is None:
        block_k = _pick_block(S, preferred)
    assert L % block_q == 0 and S % block_k == 0

    # --- head-major layout for lane-dense (seq, head_dim) tiles -------------
    # TODO(synk): these transposes cost one extra HBM pass each; indexing the
    # original (B, L, H, E) layout directly would need a size-1 second-minor
    # (head) block dim, which Mosaic does not tile cleanly, so the canonical
    # flash-attention head-major layout is kept.
    q_bh = jnp.transpose(queries, (0, 2, 1, 3))          # (B, H, L, E)
    k_bh = jnp.transpose(keys, (0, 2, 1, 3))             # (B, H, S, E)
    v_bh = jnp.transpose(values, (0, 2, 1, 3))           # (B, H, S, D)

    grid = (B, H, L // block_q, S // block_k)
    in_specs = [
        pl.BlockSpec((1, 1, block_q, E), lambda b, h, qi, ki: (b, h, qi, 0)),
        pl.BlockSpec((1, 1, block_k, E), lambda b, h, qi, ki: (b, h, ki, 0)),
        pl.BlockSpec((1, 1, block_k, D), lambda b, h, qi, ki: (b, h, ki, 0)),
    ]
    inputs = [q_bh, k_bh, v_bh]
    mask_bytes = 0
    if has_mask:
        mask_i8 = (jnp.asarray(attn_mask) != 0).astype(jnp.int8)   # 1 => masked
        mh = mask_i8.shape[1]
        if mh == 1:
            mask_map = lambda b, h, qi, ki: (b, 0, qi, ki)
        else:
            mask_map = lambda b, h, qi, ki: (b, h, qi, ki)
        in_specs.append(pl.BlockSpec((1, 1, block_q, block_k), mask_map))
        inputs.append(mask_i8)
        mask_bytes = int(mask_i8.size) * (H if mh == 1 else 1)

    out_specs = pl.BlockSpec((1, 1, block_q, D), lambda b, h, qi, ki: (b, h, qi, 0))
    scratch_shapes = [
        pltpu.VMEM((block_q, 1), jnp.float32),            # running max   m
        pltpu.VMEM((block_q, 1), jnp.float32),            # running denom l
        pltpu.VMEM((block_q, D), jnp.float32),            # output accumulator
    ]

    kernel = functools.partial(_flash_attention_kernel, scale=scale,
                               causal=causal, has_mask=has_mask)

    cost = pl.CostEstimate(
        flops=int(2 * B * H * L * S * (E + D)),
        transcendentals=int(B * H * L * S),
        bytes_accessed=int((q_bh.size + k_bh.size + v_bh.size
                            + B * H * L * D) * itemsize + mask_bytes))

    out_bh = pl.pallas_call(
        kernel,
        out_shape=jax.ShapeDtypeStruct((B, H, L, D), queries.dtype),
        grid_spec=pltpu.PrefetchScalarGridSpec(
            num_scalar_prefetch=0,
            grid=grid,
            in_specs=in_specs,
            out_specs=out_specs,
            scratch_shapes=scratch_shapes),
        compiler_params=pltpu.CompilerParams(
            dimension_semantics=("parallel", "parallel", "parallel", "arbitrary"),
            vmem_limit_bytes=vmem_limit),
        cost_estimate=cost,
    )(*inputs)

    V = jnp.transpose(out_bh, (0, 2, 1, 3))               # (B, L, H, D)
    # TODO(synk): output_attention=True would need a second (B,H,L,S) output;
    # the flash formulation never materializes A, so None is returned (matches
    # the module's default output_attention=False path).
    return V, None


def _reference_full_attention(queries, keys, values, attn_mask, scale, mask_flag):
    B, L, H, E = queries.shape
    scale = scale if scale is not None else 1.0 / sqrt(E)
    scores = jnp.einsum('blhe,bshe->bhls',
                        queries.astype(jnp.float32), keys.astype(jnp.float32))
    if mask_flag and attn_mask is not None:
        scores = jnp.where(attn_mask, -jnp.inf, scores)
    A = jax.nn.softmax(scale * scores, axis=-1)
    V = jnp.einsum('bhls,bshd->blhd', A, values.astype(jnp.float32))
    return V.astype(queries.dtype)


if __name__ == "__main__":
    key = jax.random.PRNGKey(0)

    # --- explicit-mask and unmasked paths (single kv tile) ------------------
    B, L, S, H, E, D = 2, 8, 8, 4, 32, 32
    kq, kk, kv = jax.random.split(key, 3)
    queries = jax.random.normal(kq, (B, L, H, E), dtype=jnp.float32)
    keys = jax.random.normal(kk, (B, S, H, E), dtype=jnp.float32)
    values = jax.random.normal(kv, (B, S, H, D), dtype=jnp.float32)

    row = jnp.arange(L)[:, None]
    col = jnp.arange(S)[None, :]
    attn_mask = jnp.broadcast_to(col > row, (B, 1, L, S))   # True => masked

    v_mask, _ = full_attention(queries, keys, values, attn_mask,
                               mask_flag=True, scale=None)
    v_mask = jax.block_until_ready(v_mask)
    v_mask_ref = _reference_full_attention(queries, keys, values, attn_mask,
                                           None, True)
    assert v_mask.shape == (B, L, H, D)
    assert jnp.allclose(v_mask, v_mask_ref, atol=1e-3, rtol=1e-3), "explicit-mask mismatch"

    v_plain, _ = full_attention(queries, keys, values, None,
                                mask_flag=False, scale=None)
    v_plain = jax.block_until_ready(v_plain)
    v_plain_ref = _reference_full_attention(queries, keys, values, None,
                                            None, False)
    assert jnp.allclose(v_plain, v_plain_ref, atol=1e-3, rtol=1e-3), "unmasked mismatch"

    # --- default causal path with multiple kv tiles (online softmax + skip) --
    L2 = S2 = 16
    kq2, kk2, kv2 = jax.random.split(jax.random.PRNGKey(1), 3)
    q2 = jax.random.normal(kq2, (B, L2, H, E), dtype=jnp.float32)
    k2 = jax.random.normal(kk2, (B, S2, H, E), dtype=jnp.float32)
    v2 = jax.random.normal(kv2, (B, S2, H, D), dtype=jnp.float32)
    causal_ref_mask = jnp.broadcast_to(
        jnp.arange(S2)[None, :] > jnp.arange(L2)[:, None], (B, 1, L2, S2))
    v_causal, _ = full_attention(q2, k2, v2, None, mask_flag=True, scale=None,
                                 block_q=8, block_k=8)
    v_causal = jax.block_until_ready(v_causal)
    v_causal_ref = _reference_full_attention(q2, k2, v2, causal_ref_mask,
                                             None, True)
    assert jnp.allclose(v_causal, v_causal_ref, atol=1e-3, rtol=1e-3), "causal mismatch"

    print("KERNEL_OK")
</pallas_src>

<mosaic_0001>
module attributes {stable_mosaic.version = 11 : i64} {
  func.func @_flash_attention_kernel(%arg0: i32, %arg1: i32, %arg2: i32, %arg3: i32, %arg4: memref<1x1x8x32xf32, #tpu.memory_space<vmem>>, %arg5: memref<1x1x8x32xf32, #tpu.memory_space<vmem>>, %arg6: memref<1x1x8x32xf32, #tpu.memory_space<vmem>>, %arg7: memref<1x1x8x8xi8, #tpu.memory_space<vmem>>, %arg8: memref<1x1x8x32xf32, #tpu.memory_space<vmem>>, %arg9: memref<8x1xf32, #tpu.memory_space<vmem>>, %arg10: memref<8x1xf32, #tpu.memory_space<vmem>>, %arg11: memref<8x32xf32, #tpu.memory_space<vmem>>) attributes {dimension_semantics = [#tpu.dimension_semantics<parallel>, #tpu.dimension_semantics<parallel>, #tpu.dimension_semantics<parallel>, #tpu.dimension_semantics<arbitrary>], iteration_bounds = array<i64: 2, 4, 1, 1>, scalar_prefetch = 0 : i64, scratch_operands = 3 : i64, tpu.core_type = #tpu.core_type<tc>, window_params = [{transform_indices = @transform_0, window_bounds = array<i64: 1, 1, 8, 32>}, {transform_indices = @transform_1, window_bounds = array<i64: 1, 1, 8, 32>}, {transform_indices = @transform_2, window_bounds = array<i64: 1, 1, 8, 32>}, {transform_indices = @transform_3, window_bounds = array<i64: 1, 1, 8, 8>}, {transform_indices = @transform_4, window_bounds = array<i64: 1, 1, 8, 32>}]} {
    %c0_i32 = arith.constant 0 : i32
    %0 = arith.cmpi eq, %arg3, %c0_i32 : i32
    %1 = arith.extui %0 : i1 to i32
    %c0_i32_0 = arith.constant 0 : i32
    %2 = arith.cmpi ne, %1, %c0_i32_0 : i32
    scf.if %2 {
      %cst_36 = arith.constant -2.38197633E+38 : f32
      %44 = vector.broadcast %cst_36 : f32 to vector<8x1xf32>
      %c0_37 = arith.constant 0 : index
      %c0_38 = arith.constant 0 : index
      %45 = vector.load %arg9[%c0_37, %c0_38] : memref<8x1xf32, #tpu.memory_space<vmem>>, vector<8x1xf32>
      tpu.vector_store %arg9[%c0_37, %c0_38], %44 {strides = array<i32>} : memref<8x1xf32, #tpu.memory_space<vmem>>, vector<8x1xf32>,
      %cst_39 = arith.constant 0.000000e+00 : f32
      %46 = vector.broadcast %cst_39 : f32 to vector<8x1xf32>
      %c0_40 = arith.constant 0 : index
      %c0_41 = arith.constant 0 : index
      %47 = vector.load %arg10[%c0_40, %c0_41] : memref<8x1xf32, #tpu.memory_space<vmem>>, vector<8x1xf32>
      tpu.vector_store %arg10[%c0_40, %c0_41], %46 {strides = array<i32>} : memref<8x1xf32, #tpu.memory_space<vmem>>, vector<8x1xf32>,
      %cst_42 = arith.constant 0.000000e+00 : f32
      %48 = vector.broadcast %cst_42 : f32 to vector<8x32xf32>
      %c0_43 = arith.constant 0 : index
      %c0_44 = arith.constant 0 : index
      %49 = vector.load %arg11[%c0_43, %c0_44] : memref<8x32xf32, #tpu.memory_space<vmem>>, vector<8x32xf32>
      tpu.vector_store %arg11[%c0_43, %c0_44], %48 {strides = array<i32>} : memref<8x32xf32, #tpu.memory_space<vmem>>, vector<8x32xf32>,
    } else {
    }
    %c0 = arith.constant 0 : index
    %c0_1 = arith.constant 0 : index
    %c0_2 = arith.constant 0 : index
    %c0_3 = arith.constant 0 : index
    %3 = vector.load %arg4[%c0, %c0_1, %c0_2, %c0_3] : memref<1x1x8x32xf32, #tpu.memory_space<vmem>>, vector<1x1x8x32xf32>
    %4 = vector.shape_cast %3 : vector<1x1x8x32xf32> to vector<8x32xf32>
    %cst = arith.constant 0.176776692 : f32
    %5 = vector.broadcast %cst : f32 to vector<8x32xf32>
    %6 = arith.mulf %4, %5 : vector<8x32xf32>
    %c0_4 = arith.constant 0 : index
    %c0_5 = arith.constant 0 : index
    %c0_6 = arith.constant 0 : index
    %c0_7 = arith.constant 0 : index
    %7 = vector.load %arg5[%c0_4, %c0_5, %c0_6, %c0_7] : memref<1x1x8x32xf32, #tpu.memory_space<vmem>>, vector<1x1x8x32xf32>
    %8 = vector.shape_cast %7 : vector<1x1x8x32xf32> to vector<8x32xf32>
    %c0_8 = arith.constant 0 : index
    %c0_9 = arith.constant 0 : index
    %c0_10 = arith.constant 0 : index
    %c0_11 = arith.constant 0 : index
    %9 = vector.load %arg6[%c0_8, %c0_9, %c0_10, %c0_11] : memref<1x1x8x32xf32, #tpu.memory_space<vmem>>, vector<1x1x8x32xf32>
    %10 = vector.shape_cast %9 : vector<1x1x8x32xf32> to vector<8x32xf32>
    %cst_12 = arith.constant dense<0.000000e+00> : vector<8x8xf32>
    %11 = tpu.matmul %6, %8, %cst_12 {dimension_numbers = #tpu.dot_dimension_numbers<[1], [1], [0], [0], [0, 0, 1, 0], [], []>} : vector<8x32xf32>, vector<8x32xf32>, vector<8x8xf32> -> vector<8x8xf32>
    %c0_13 = arith.constant 0 : index
    %c0_14 = arith.constant 0 : index
    %c0_15 = arith.constant 0 : index
    %c0_16 = arith.constant 0 : index
    %12 = vector.load %arg7[%c0_13, %c0_14, %c0_15, %c0_16] : memref<1x1x8x8xi8, #tpu.memory_space<vmem>>, vector<1x1x8x8xi8>
    %13 = vector.shape_cast %12 : vector<1x1x8x8xi8> to vector<8x8xi8>
    %14 = arith.extsi %13 : vector<8x8xi8> to vector<8x8xi32>
    %c0_i32_17 = arith.constant 0 : i32
    %15 = vector.broadcast %c0_i32_17 : i32 to vector<8x8xi32>
    %16 = arith.cmpi ne, %14, %15 : vector<8x8xi32>
    %cst_18 = arith.constant -2.38197633E+38 : f32
    %17 = vector.broadcast %cst_18 : f32 to vector<8x8xf32>
    %18 = arith.select %16, %17, %11 : vector<8x8xi1>, vector<8x8xf32>
    %c0_19 = arith.constant 0 : index
    %c0_20 = arith.constant 0 : index
    %19 = vector.load %arg9[%c0_19, %c0_20] : memref<8x1xf32, #tpu.memory_space<vmem>>, vector<8x1xf32>
    %cst_21 = arith.constant dense<0xFF800000> : vector<8xf32>
    %20 = vector.multi_reduction <maximumf>, %18, %cst_21 [1] : vector<8x8xf32> to vector<8xf32>
    %21 = vector.shape_cast %20 : vector<8xf32> to vector<8x1xf32>
    %22 = arith.maximumf %19, %21 : vector<8x1xf32>
    %23 = arith.subf %19, %22 : vector<8x1xf32>
    %24 = math.exp %23 : vector<8x1xf32>
    %25 = vector.broadcast %22 : vector<8x1xf32> to vector<8x8xf32>
    %26 = arith.subf %18, %25 : vector<8x8xf32>
    %27 = math.exp %26 : vector<8x8xf32>
    %c0_22 = arith.constant 0 : index
    %c0_23 = arith.constant 0 : index
    %28 = vector.load %arg10[%c0_22, %c0_23] : memref<8x1xf32, #tpu.memory_space<vmem>>, vector<8x1xf32>
    %29 = arith.mulf %24, %28 : vector<8x1xf32>
    %cst_24 = arith.constant dense<0.000000e+00> : vector<8xf32>
    %30 = vector.multi_reduction <add>, %27, %cst_24 [1] : vector<8x8xf32> to vector<8xf32>
    %31 = vector.shape_cast %30 : vector<8xf32> to vector<8x1xf32>
    %32 = arith.addf %29, %31 : vector<8x1xf32>
    %c0_25 = arith.constant 0 : index
    %c0_26 = arith.constant 0 : index
    %33 = vector.load %arg10[%c0_25, %c0_26] : memref<8x1xf32, #tpu.memory_space<vmem>>, vector<8x1xf32>
    tpu.vector_store %arg10[%c0_25, %c0_26], %32 {strides = array<i32>} : memref<8x1xf32, #tpu.memory_space<vmem>>, vector<8x1xf32>,
    %c0_27 = arith.constant 0 : index
    %c0_28 = arith.constant 0 : index
    %34 = vector.load %arg11[%c0_27, %c0_28] : memref<8x32xf32, #tpu.memory_space<vmem>>, vector<8x32xf32>
    %35 = vector.broadcast %24 : vector<8x1xf32> to vector<8x32xf32>
    %36 = arith.mulf %35, %34 : vector<8x32xf32>
    %cst_29 = arith.constant dense<0.000000e+00> : vector<8x32xf32>
    %37 = tpu.matmul %27, %10, %cst_29 {dimension_numbers = #tpu.dot_dimension_numbers<[1], [0], [0], [1], [0, 0, 1, 1], [], []>} : vector<8x8xf32>, vector<8x32xf32>, vector<8x32xf32> -> vector<8x32xf32>
    %38 = arith.addf %36, %37 : vector<8x32xf32>
    %c0_30 = arith.constant 0 : index
    %c0_31 = arith.constant 0 : index
    %39 = vector.load %arg11[%c0_30, %c0_31] : memref<8x32xf32, #tpu.memory_space<vmem>>, vector<8x32xf32>
    tpu.vector_store %arg11[%c0_30, %c0_31], %38 {strides = array<i32>} : memref<8x32xf32, #tpu.memory_space<vmem>>, vector<8x32xf32>,
    %c0_32 = arith.constant 0 : index
    %c0_33 = arith.constant 0 : index
    %40 = vector.load %arg9[%c0_32, %c0_33] : memref<8x1xf32, #tpu.memory_space<vmem>>, vector<8x1xf32>
    tpu.vector_store %arg9[%c0_32, %c0_33], %22 {strides = array<i32>} : memref<8x1xf32, #tpu.memory_space<vmem>>, vector<8x1xf32>,
    %c0_i32_34 = arith.constant 0 : i32
    %41 = arith.cmpi eq, %arg3, %c0_i32_34 : i32
    %42 = arith.extui %41 : i1 to i32
    %c0_i32_35 = arith.constant 0 : i32
    %43 = arith.cmpi ne, %42, %c0_i32_35 : i32
    scf.if %43 {
      %c0_36 = arith.constant 0 : index
      %c0_37 = arith.constant 0 : index
      %44 = vector.load %arg10[%c0_36, %c0_37] : memref<8x1xf32, #tpu.memory_space<vmem>>, vector<8x1xf32>
      %45 = tpu.reciprocal %44 {approx = true} : vector<8x1xf32> -> vector<8x1xf32>
      %46 = arith.mulf %44, %45 : vector<8x1xf32>
      %cst_38 = arith.constant 2.000000e+00 : f32
      %47 = vector.broadcast %cst_38 : f32 to vector<8x1xf32>
      %48 = arith.subf %47, %46 : vector<8x1xf32>
      %49 = arith.mulf %45, %48 : vector<8x1xf32>
      %c0_39 = arith.constant 0 : index
      %c0_40 = arith.constant 0 : index
      %50 = vector.load %arg11[%c0_39, %c0_40] : memref<8x32xf32, #tpu.memory_space<vmem>>, vector<8x32xf32>
      %51 = vector.broadcast %49 : vector<8x1xf32> to vector<8x32xf32>
      %52 = arith.mulf %50, %51 : vector<8x32xf32>
      %c0_41 = arith.constant 0 : index
      %c0_42 = arith.constant 0 : index
      %c0_43 = arith.constant 0 : index
      %c0_44 = arith.constant 0 : index
      %53 = vector.load %arg8[%c0_41, %c0_42, %c0_43, %c0_44] : memref<1x1x8x32xf32, #tpu.memory_space<vmem>>, vector<1x1x8x32xf32>
      %54 = vector.shape_cast %53 : vector<1x1x8x32xf32> to vector<8x32xf32>
      %55 = vector.shape_cast %52 : vector<8x32xf32> to vector<1x1x8x32xf32>
      tpu.vector_store %arg8[%c0_41, %c0_42, %c0_43, %c0_44], %55 {strides = array<i32>} : memref<1x1x8x32xf32, #tpu.memory_space<vmem>>, vector<1x1x8x32xf32>,
    } else {
    }
    return
  }
  func.func @transform_0(%arg0: i32, %arg1: i32, %arg2: i32, %arg3: i32) -> (i32, i32, i32, i32) {
    %c0_i32 = arith.constant 0 : i32
    %c0_i32_0 = arith.constant 0 : i32
    return %arg0, %arg1, %arg2, %c0_i32 : i32, i32, i32, i32
  }
  func.func @transform_1(%arg0: i32, %arg1: i32, %arg2: i32, %arg3: i32) -> (i32, i32, i32, i32) {
    %c0_i32 = arith.constant 0 : i32
    %c0_i32_0 = arith.constant 0 : i32
    return %arg0, %arg1, %arg3, %c0_i32 : i32, i32, i32, i32
  }
  func.func @transform_2(%arg0: i32, %arg1: i32, %arg2: i32, %arg3: i32) -> (i32, i32, i32, i32) {
    %c0_i32 = arith.constant 0 : i32
    %c0_i32_0 = arith.constant 0 : i32
    return %arg0, %arg1, %arg3, %c0_i32 : i32, i32, i32, i32
  }
  func.func @transform_3(%arg0: i32, %arg1: i32, %arg2: i32, %arg3: i32) -> (i32, i32, i32, i32) {
    %c0_i32 = arith.constant 0 : i32
    %c0_i32_0 = arith.constant 0 : i32
    return %arg0, %c0_i32, %arg2, %arg3 : i32, i32, i32, i32
  }
  func.func @transform_4(%arg0: i32, %arg1: i32, %arg2: i32, %arg3: i32) -> (i32, i32, i32, i32) {
    %c0_i32 = arith.constant 0 : i32
    %c0_i32_0 = arith.constant 0 : i32
    return %arg0, %arg1, %arg2, %c0_i32 : i32, i32, i32, i32
  }
}

</mosaic_0001>

<llo_original>
// kernel: tpu_custom_call.1
$region0: #{tpu_custom_call.1}
  #allocation0 [shape = 'u32[]', space=smem, size = 0x4, offset = 0x4, fixed_abs, tag = 'smem constant byte address 0x4 - core index']
  #allocation1 [shape = 'u32[144,128]{1,0:T(1,128)}', space=vmem, size = 0x12000, scoped, tag = 'internal scratch']
  #allocation2 [shape = 'f32[8,1]{1,0:T(8,128)}', space=vmem, size = 0x1000, scoped, tag = 'scratch operand']
  #allocation3 [shape = 'f32[8,1]{1,0:T(8,128)}', space=vmem, size = 0x1000, scoped, tag = 'scratch operand']
  #allocation4 [shape = 'f32[8,32]{1,0:T(8,128)}', space=vmem, size = 0x1000, scoped, tag = 'scratch operand']
  %s0 = inlined_call_operand.hbm [shape: f32[2,4,8,32], index: 0, kind: input, shape index: {}]
  %s1 = inlined_call_operand.hbm [shape: f32[2,4,8,32], index: 1, kind: input, shape index: {}]
  %s2 = inlined_call_operand.hbm [shape: f32[2,4,8,32], index: 2, kind: input, shape index: {}]
  %s3 = inlined_call_operand.vmem [shape: s8[2,1,8,8], index: 3, kind: input, shape index: {}]
  %s4 = inlined_call_operand.hbm [shape: f32[2,4,8,32], index: 4, kind: output, shape index: {}]
  %s5 = sld [smem:[#allocation0]]
  $region69: #{tpu_custom_call.1} parent=0
    _
  %s7 = ssub.s32 1, %s5
  %s8 = scalar_select 0, %s7, %s5
  $region1: #{tpu_custom_call.1} parent=0
    #allocation5 [shape = 'u8[8192]{0}', space=vmem, size = 0x2000, scoped, tag = 'input window, operand 0']
    #allocation6 [shape = 's32[2]{0}', space=sflag, size = 0x8, scoped, tag = 'scoped memory for tpu_custom_call.1']
    #allocation7 [shape = 's32[2]{0}', space=sflag, size = 0x8, scoped, tag = 'scoped memory for tpu_custom_call.1']
    #allocation8 [shape = 'u8[8192]{0}', space=vmem, size = 0x2000, scoped, tag = 'input window, operand 1']
    #allocation9 [shape = 's32[2]{0}', space=sflag, size = 0x8, scoped, tag = 'scoped memory for tpu_custom_call.1']
    #allocation10 [shape = 'u8[8192]{0}', space=vmem, size = 0x2000, scoped, tag = 'input window, operand 2']
    #allocation11 [shape = 'u8[8192]{0}', space=vmem, size = 0x2000, scoped, tag = 'output window, operand 0']
    %9 = vsyncpa [#allocation6], 0
    %s10 = scalar_lea.sflag [#allocation6], 1
    %11 = vsyncpa %s10, 0
    %12 = vsyncpa [#allocation9], 0
    %s13 = scalar_lea.sflag [#allocation9], 1
    %14 = vsyncpa %s13, 0
    %15 = vsyncpa [#allocation7], 0
    %s16 = scalar_lea.sflag [#allocation7], 1
    %17 = vsyncpa %s16, 0
    loop: start=0, step=1, limit=10
    $region2: #{tpu_custom_call.1} parent=1 // loop_pre_header
      _
    $region3: #{tpu_custom_call.1} parent=1 // loop_header
      %s19 = sphi 0, %s23
      %p20 = scmp.ge.s32.totalorder %s19, 10
      %s26 = sphi 0, %s52
      %s27 = sphi 0, %s48
      %s28 = sphi 0, %s44
      %s29 = sphi 0, %s40
      %s30 = sphi 0, %s26
      %s31 = sphi 0, %s27
      %s32 = sphi 0, %s28
      %s33 = sphi 0, %s29
      %s34 = sphi 0, %s30
      %s35 = sphi 0, %s31
      %s36 = sphi 0, %s32
      %s37 = sphi 0, %s33
      %s59 = sphi 0, %s61
      %s62 = sphi 0, %s59
      %s63 = sphi 0, %s62
      %s79 = sphi 0, %s63
      %s89 = sphi 0, %s91
      %s92 = sphi 0, %s89
      %s93 = sphi 0, %s92
      %s109 = sphi 0, %s93
      %s119 = sphi 0, %s121
      %s122 = sphi 0, %s119
      %s123 = sphi 0, %s122
      %s139 = sphi 0, %s123
      %s149 = sphi 0, %s151
      %s152 = sphi 0, %s149
      %s153 = sphi 0, %s152
      %s169 = sphi 0, %s153
      %s179 = sphi 0, %s181
      %s182 = sphi 0, %s179
      %s183 = sphi 0, %s182
      %s199 = sphi 0, %s183
    $region4: #{tpu_custom_call.1} parent=1 // loop_header_branch
      %22 = sbr.rel (%p20) target = $region8
    $region5: #{tpu_custom_call.1} parent=1 // loop_body
      %s24 = ssub.s32 %s19, 1
      %s25 = ssub.s32 %s19, 2
      %s38 = sadd.s32 1, %s29
      %p39 = scmp.ge.s32.totalorder %s38, 1
      %s40 = scalar_select %p39, 0, %s38
      %s41 = sadd.s32 1, %s28
      %s42 = scalar_select %p39, %s41, %s28
      %p43 = scmp.ge.s32.totalorder %s42, 1
      %s44 = scalar_select %p43, 0, %s42
      %s45 = sadd.s32 1, %s27
      %s46 = scalar_select %p43, %s45, %s27
      %p47 = scmp.ge.s32.totalorder %s46, 4
      %s48 = scalar_select %p47, 0, %s46
      %s49 = sadd.s32 1, %s26
      %s50 = scalar_select %p47, %s49, %s26
      %p51 = scmp.ge.s32.totalorder %s50, 2
      %s52 = scalar_select %p51, 0, %s50
      %s53 = ssub.s32 %s26, %s52
      %s54 = ssub.s32 %s27, %s48
      %s55 = sor.u32 %s53, %s54
      %s56 = ssub.s32 %s28, %s44
      %s57 = sor.u32 %s55, %s56
      %p58 = scmp.eq.s32.totalorder %s57, 0
      %s60 = sadd.s32 %s59, 1
      %s61 = scalar_select %p58, %s59, %s60
      %p64 = pneg %p58
      %p65 = scmp.eq.s32.totalorder %s19, 7
      %p66 = por %p64, %p65
      %p67 = scmp.ne.s32.totalorder %s59, %s62
      %p68 = scmp.eq.s32.totalorder %s19, 0
      %p69 = por %p67, %p68
      %p70 = scmp.ne.s32.totalorder %s59, %s62
      %p71 = scmp.eq.s32.totalorder %s24, 7
      %p72 = por %p70, %p71
      %p73 = scmp.ne.s32.totalorder %s62, %s63
      %p74 = scmp.eq.s32.totalorder %s24, 0
      %p75 = por %p73, %p74
      %p76 = scmp.ne.s32.totalorder %s62, %s63
      %p77 = scmp.eq.s32.totalorder %s25, 7
      %p78 = por %p76, %p77
      %p80 = scmp.ne.s32.totalorder %s63, %s79
      %p81 = scmp.eq.s32.totalorder %s25, 0
      %p82 = por %p80, %p81
      %s83 = ssub.s32 %s26, %s52
      %s84 = ssub.s32 %s27, %s48
      %s85 = sor.u32 %s83, %s84
      %s86 = ssub.s32 %s29, %s40
      %s87 = sor.u32 %s85, %s86
      %p88 = scmp.eq.s32.totalorder %s87, 0
      %s90 = sadd.s32 %s89, 1
      %s91 = scalar_select %p88, %s89, %s90
      %p94 = pneg %p88
      %p95 = scmp.eq.s32.totalorder %s19, 7
      %p96 = por %p94, %p95
      %p97 = scmp.ne.s32.totalorder %s89, %s92
      %p98 = scmp.eq.s32.totalorder %s19, 0
      %p99 = por %p97, %p98
      %p100 = scmp.ne.s32.totalorder %s89, %s92
      %p101 = scmp.eq.s32.totalorder %s24, 7
      %p102 = por %p100, %p101
      %p103 = scmp.ne.s32.totalorder %s92, %s93
      %p104 = scmp.eq.s32.totalorder %s24, 0
      %p105 = por %p103, %p104
      %p106 = scmp.ne.s32.totalorder %s92, %s93
      %p107 = scmp.eq.s32.totalorder %s25, 7
      %p108 = por %p106, %p107
      %p110 = scmp.ne.s32.totalorder %s93, %s109
      %p111 = scmp.eq.s32.totalorder %s25, 0
      %p112 = por %p110, %p111
      %s113 = ssub.s32 %s26, %s52
      %s114 = ssub.s32 %s27, %s48
      %s115 = sor.u32 %s113, %s114
      %s116 = ssub.s32 %s29, %s40
      %s117 = sor.u32 %s115, %s116
      %p118 = scmp.eq.s32.totalorder %s117, 0
      %s120 = sadd.s32 %s119, 1
      %s121 = scalar_select %p118, %s119, %s120
      %p124 = pneg %p118
      %p125 = scmp.eq.s32.totalorder %s19, 7
      %p126 = por %p124, %p125
      %p127 = scmp.ne.s32.totalorder %s119, %s122
      %p128 = scmp.eq.s32.totalorder %s19, 0
      %p129 = por %p127, %p128
      %p130 = scmp.ne.s32.totalorder %s119, %s122
      %p131 = scmp.eq.s32.totalorder %s24, 7
      %p132 = por %p130, %p131
      %p133 = scmp.ne.s32.totalorder %s122, %s123
      %p134 = scmp.eq.s32.totalorder %s24, 0
      %p135 = por %p133, %p134
      %p136 = scmp.ne.s32.totalorder %s122, %s123
      %p137 = scmp.eq.s32.totalorder %s25, 7
      %p138 = por %p136, %p137
      %p140 = scmp.ne.s32.totalorder %s123, %s139
      %p141 = scmp.eq.s32.totalorder %s25, 0
      %p142 = por %p140, %p141
      %s143 = ssub.s32 %s26, %s52
      %s144 = ssub.s32 %s28, %s44
      %s145 = sor.u32 %s143, %s144
      %s146 = ssub.s32 %s29, %s40
      %s147 = sor.u32 %s145, %s146
      %p148 = scmp.eq.s32.totalorder %s147, 0
      %s150 = sadd.s32 %s149, 1
      %s151 = scalar_select %p148, %s149, %s150
      %p154 = pneg %p148
      %p155 = scmp.eq.s32.totalorder %s19, 7
      %p156 = por %p154, %p155
      %p157 = scmp.ne.s32.totalorder %s149, %s152
      %p158 = scmp.eq.s32.totalorder %s19, 0
      %p159 = por %p157, %p158
      %p160 = scmp.ne.s32.totalorder %s149, %s152
      %p161 = scmp.eq.s32.totalorder %s24, 7
      %p162 = por %p160, %p161
      %p163 = scmp.ne.s32.totalorder %s152, %s153
      %p164 = scmp.eq.s32.totalorder %s24, 0
      %p165 = por %p163, %p164
      %p166 = scmp.ne.s32.totalorder %s152, %s153
      %p167 = scmp.eq.s32.totalorder %s25, 7
      %p168 = por %p166, %p167
      %p170 = scmp.ne.s32.totalorder %s153, %s169
      %p171 = scmp.eq.s32.totalorder %s25, 0
      %p172 = por %p170, %p171
      %s173 = ssub.s32 %s26, %s52
      %s174 = ssub.s32 %s27, %s48
      %s175 = sor.u32 %s173, %s174
      %s176 = ssub.s32 %s28, %s44
      %s177 = sor.u32 %s175, %s176
      %p178 = scmp.eq.s32.totalorder %s177, 0
      %s180 = sadd.s32 %s179, 1
      %s181 = scalar_select %p178, %s179, %s180
      %p184 = pneg %p178
      %p185 = scmp.eq.s32.totalorder %s19, 7
      %p186 = por %p184, %p185
      %p187 = scmp.ne.s32.totalorder %s179, %s182
      %p188 = scmp.eq.s32.totalorder %s19, 0
      %p189 = por %p187, %p188
      %p190 = scmp.ne.s32.totalorder %s179, %s182
      %p191 = scmp.eq.s32.totalorder %s24, 7
      %p192 = por %p190, %p191
      %p193 = scmp.ne.s32.totalorder %s182, %s183
      %p194 = scmp.eq.s32.totalorder %s24, 0
      %p195 = por %p193, %p194
      %p196 = scmp.ne.s32.totalorder %s182, %s183
      %p197 = scmp.eq.s32.totalorder %s25, 7
      %p198 = por %p196, %p197
      %p200 = scmp.ne.s32.totalorder %s183, %s199
      %p201 = scmp.eq.s32.totalorder %s25, 0
      %p202 = por %p200, %p201
      %p203 = scmp.le.s32.totalorder 1, %s19
      %p204 = scmp.lt.s32.totalorder %s19, 9
      %p205 = pnand %p203, %p204
      %p206 = pneg %p205
      // Predicated region
      $region9: #{tpu_custom_call.1} parent=5 // pred_check
        _
      $region10: #{tpu_custom_call.1} parent=5 // pred_check_branch
        %208 = sbr.rel (%p205) target = $region12
      $region11: #{tpu_custom_call.1} parent=5 // pred_region
        %s209 = ssub.s32 %s19, 1
      $region12: #{tpu_custom_call.1} parent=5 // pred_fallthru
        _
      %p210 = scmp.lt.s32.totalorder %s19, 8
      // Predicated region
      $region13: #{tpu_custom_call.1} parent=5 // pred_check
        %p211 = pneg %p210
      $region14: #{tpu_custom_call.1} parent=5 // pred_check_branch
        %213 = sbr.rel (%p211) target = $region16
      $region15: #{tpu_custom_call.1} parent=5 // pred_region
        // Predicated region
        $region17: #{tpu_custom_call.1} parent=15 // pred_check
          %p214 = pneg %p69
        $region18: #{tpu_custom_call.1} parent=15 // pred_check_branch
          %216 = sbr.rel (%p214) target = $region20
        $region19: #{tpu_custom_call.1} parent=15 // pred_region
          %s217 = sand.u32 %s59, 1
          %s218 = scalar_lea.sflag [#allocation6], %s217
          %s219 = sand.u32 %s59, 1
          %s220 = smul.addr %s219, 8
          %s221 = scalar_lea.vmem [#allocation5], %s220
          %s223 = ssub.s32 128, 128
          %224 = vsyncadd %s218, %s223
          %s225 = sadd.s32 %s28, %s27
          %s226 = smul.addr %s26, 4
          %s227 = sadd.s32 %s225, %s226
          %s228 = smul.addr %s227, 128
          %s229 = scalar_lea.hbm %s0, %s228
          %s231 = sshll.u32 %s221, 4
          %s232 = int_to_ptr.vmem [resolvable:$true] %s231
          %234 = dma.hbm_to_vmem [thread:$0]  %s229, 128, %s232, %s218
        $region20: #{tpu_custom_call.1} parent=15 // pred_fallthru
          _
        // Predicated region
        $region21: #{tpu_custom_call.1} parent=15 // pred_check
          %p235 = pneg %p99
        $region22: #{tpu_custom_call.1} parent=15 // pred_check_branch
          %237 = sbr.rel (%p235) target = $region24
        $region23: #{tpu_custom_call.1} parent=15 // pred_region
          %s238 = sand.u32 %s19, 1
          %s239 = scalar_lea.sflag [#allocation9], %s238
          %s240 = sand.u32 %s89, 1
          %s241 = smul.addr %s240, 8
          %s242 = scalar_lea.vmem [#allocation8], %s241
          %s244 = ssub.s32 128, 128
          %245 = vsyncadd %s239, %s244
          %s246 = sadd.s32 %s29, %s27
          %s247 = smul.addr %s26, 4
          %s248 = sadd.s32 %s246, %s247
          %s249 = smul.addr %s248, 128
          %s250 = scalar_lea.hbm %s1, %s249
          %s252 = sshll.u32 %s242, 4
          %s253 = int_to_ptr.vmem [resolvable:$true] %s252
          %255 = dma.hbm_to_vmem [thread:$0]  %s250, 128, %s253, %s239
        $region24: #{tpu_custom_call.1} parent=15 // pred_fallthru
          _
        // Predicated region
        $region25: #{tpu_custom_call.1} parent=15 // pred_check
          %p256 = pneg %p129
        $region26: #{tpu_custom_call.1} parent=15 // pred_check_branch
          %258 = sbr.rel (%p256) target = $region28
        $region27: #{tpu_custom_call.1} parent=15 // pred_region
          %s259 = sand.u32 %s19, 1
          %s260 = scalar_lea.sflag [#allocation9], %s259
          %s261 = sand.u32 %s119, 1
          %s262 = smul.addr %s261, 8
          %s263 = scalar_lea.vmem [#allocation10], %s262
          %s265 = ssub.s32 128, 128
          %266 = vsyncadd %s260, %s265
          %s267 = sadd.s32 %s29, %s27
          %s268 = smul.addr %s26, 4
          %s269 = sadd.s32 %s267, %s268
          %s270 = smul.addr %s269, 128
          %s271 = scalar_lea.hbm %s2, %s270
          %s273 = sshll.u32 %s263, 4
          %s274 = int_to_ptr.vmem [resolvable:$true] %s273
          %276 = dma.hbm_to_vmem [thread:$0]  %s271, 128, %s274, %s260
        $region28: #{tpu_custom_call.1} parent=15 // pred_fallthru
          _
        // Predicated region
        $region29: #{tpu_custom_call.1} parent=15 // pred_check
          %p277 = pneg %p159
        $region30: #{tpu_custom_call.1} parent=15 // pred_check_branch
          %279 = sbr.rel (%p277) target = $region32
        $region31: #{tpu_custom_call.1} parent=15 // pred_region
          %p280 = scmp.lt.s32.totalorder %s26, 1
          %s281 = scalar_select %p280, %s26, 1
          %p282 = scmp.lt.s32.totalorder %s28, 0
          %s283 = scalar_select %p282, %s28, 0
          %p284 = scmp.lt.s32.totalorder %s29, 0
          %s285 = scalar_select %p284, %s29, 0
          %s286 = sadd.s32 %s285, %s283
          %s287 = sadd.s32 %s286, %s281
          %s288 = smul.addr %s287, 2
          %s289 = scalar_lea.vmem %s3, %s288
        $region32: #{tpu_custom_call.1} parent=15 // pred_fallthru
          _
      $region16: #{tpu_custom_call.1} parent=5 // pred_fallthru
        _
      %p290 = scmp.le.s32.totalorder 1, %s19
      %p291 = scmp.lt.s32.totalorder %s19, 9
      %p292 = pnand %p290, %p291
      %p293 = pneg %p292
      // Predicated region
      $region33: #{tpu_custom_call.1} parent=5 // pred_check
        _
      $region34: #{tpu_custom_call.1} parent=5 // pred_check_branch
        %295 = sbr.rel (%p292) target = $region36
      $region35: #{tpu_custom_call.1} parent=5 // pred_region
        %s296 = ssub.s32 %s19, 1
        %s297 = sand.u32 %s62, 1
        %s298 = scalar_lea.sflag [#allocation6], %s297
        %s299 = sand.u32 %s62, 1
        %s300 = smul.addr %s299, 8
        %s301 = scalar_lea.vmem [#allocation5], %s300
        // Predicated region
        $region37: #{tpu_custom_call.1} parent=35 // pred_check
          %p302 = pneg %p75
        $region38: #{tpu_custom_call.1} parent=35 // pred_check_branch
          %304 = sbr.rel (%p302) target = $region40
        $region39: #{tpu_custom_call.1} parent=35 // pred_region
          %305 = dma.done %s298, 128
        $region40: #{tpu_custom_call.1} parent=35 // pred_fallthru
          _
        %s306 = sand.u32 %s24, 1
        %s307 = scalar_lea.sflag [#allocation9], %s306
        %s308 = sand.u32 %s92, 1
        %s309 = smul.addr %s308, 8
        %s310 = scalar_lea.vmem [#allocation8], %s309
        // Predicated region
        $region41: #{tpu_custom_call.1} parent=35 // pred_check
          %p311 = pneg %p105
        $region42: #{tpu_custom_call.1} parent=35 // pred_check_branch
          %313 = sbr.rel (%p311) target = $region44
        $region43: #{tpu_custom_call.1} parent=35 // pred_region
          %314 = dma.done %s307, 128
        $region44: #{tpu_custom_call.1} parent=35 // pred_fallthru
          _
        %s315 = sand.u32 %s24, 1
        %s316 = scalar_lea.sflag [#allocation9], %s315
        %s317 = sand.u32 %s122, 1
        %s318 = smul.addr %s317, 8
        %s319 = scalar_lea.vmem [#allocation10], %s318
        // Predicated region
        $region45: #{tpu_custom_call.1} parent=35 // pred_check
          %p320 = pneg %p135
        $region46: #{tpu_custom_call.1} parent=35 // pred_check_branch
          %322 = sbr.rel (%p320) target = $region48
        $region47: #{tpu_custom_call.1} parent=35 // pred_region
          %323 = dma.done %s316, 128
        $region48: #{tpu_custom_call.1} parent=35 // pred_fallthru
          _
        %s324 = sand.u32 %s62, 1
        %s325 = scalar_lea.sflag [#allocation6], %s324
        %s326 = sand.u32 %s62, 1
        %s327 = smul.addr %s326, 8
        %s328 = scalar_lea.vmem [#allocation5], %s327
        %p329 = pneg %p75
        %p330 = pneg %p72
        %s331 = sand.u32 %s24, 1
        %s332 = scalar_lea.sflag [#allocation9], %s331
        %s333 = sand.u32 %s92, 1
        %s334 = smul.addr %s333, 8
        %s335 = scalar_lea.vmem [#allocation8], %s334
        %p336 = pneg %p105
        %p337 = pneg %p102
        %s338 = sand.u32 %s24, 1
        %s339 = scalar_lea.sflag [#allocation9], %s338
        %s340 = sand.u32 %s122, 1
        %s341 = smul.addr %s340, 8
        %s342 = scalar_lea.vmem [#allocation10], %s341
        %p343 = pneg %p135
        %p344 = pneg %p132
        %p345 = scmp.lt.s32.totalorder %s30, 1
        %s346 = scalar_select %p345, %s30, 1
        %p347 = scmp.lt.s32.totalorder %s32, 0
        %s348 = scalar_select %p347, %s32, 0
        %p349 = scmp.lt.s32.totalorder %s33, 0
        %s350 = scalar_select %p349, %s33, 0
        %s351 = sadd.s32 %s350, %s348
        %s352 = sadd.s32 %s351, %s346
        %s353 = smul.addr %s352, 2
        %s354 = scalar_lea.vmem %s3, %s353
        %p355 = pneg %p165
        %p356 = pneg %p162
        %p357 = pneg %p195
        %p358 = pneg %p192
        %s359 = sand.u32 %s182, 1
        %s360 = scalar_lea.sflag [#allocation7], %s359
        %s361 = sand.u32 %s182, 1
        %s362 = smul.addr %s361, 8
        %s363 = scalar_lea.vmem [#allocation11], %s362
        %p364 = scmp.lt.s32.totalorder %s30, 1
        %s365 = scalar_select %p364, %s30, 1
        %p366 = scmp.lt.s32.totalorder %s32, 0
        %s367 = scalar_select %p366, %s32, 0
        %p368 = scmp.lt.s32.totalorder %s33, 0
        %s369 = scalar_select %p368, %s33, 0
        %s370 = sadd.s32 %s369, %s367
        %s371 = sadd.s32 %s370, %s365
        %s372 = smul.addr %s371, 2
        %s373 = scalar_lea.vmem %s3, %s372
        %p374 = scmp.eq.s32.totalorder %s33, 0
        // Predicated region
        $region49: #{tpu_custom_call.1} parent=35 // pred_check
          %p375 = pneg %p374
        $region50: #{tpu_custom_call.1} parent=35 // pred_check_branch
          %377 = sbr.rel (%p375) target = $region52
        $region51: #{tpu_custom_call.1} parent=35 // pred_region
          %vm378 = vcmask 7168
          %379 = vst.msk [vmem:[#allocation2] sm:$0xff] %vm378, -2.3819763e+38
          %380 = vst.msk [vmem:[#allocation3] sm:$0xff] %vm378, 0.0
          %vm381 = vcmask 261120
          %382 = vst.msk [vmem:[#allocation4] sm:$0xff] %vm381, 0.0
        $region52: #{tpu_custom_call.1} parent=35 // pred_fallthru
          _
        %v383 = vld [vmem:[%s301] sm:$0xff]
        %v384 = vmul.f32 %v383, 0.17677669
        %v385 = vld [vmem:[%s310] sm:$0xff]
        %v386 = vld [vmem:[%s319] sm:$0xff]
        %vm387 = vcmask 261120
        %v389 = vsel %vm387, %v384, 0
        %v392 = vsel %vm387, %v385, 0
        %394 = vmatprep.subr.mxu0 0.0
        %395 = vmatpush1.xpose.msra.mxu0 0.0
        %396 = vmatprep.subr.mxu0 0.0
        %397 = vmatpush1.xpose.msra.mxu0 0.0
        %398 = vmatprep.subr.mxu0 0.0
        %399 = vmatpush1.xpose.msra.mxu0 0.0
        %400 = vmatprep.subr.mxu0 0.0
        %401 = vmatpush1.xpose.msra.mxu0 0.0
        %402 = vmatprep.subr.mxu0 0.0
        %403 = vmatpush1.xpose.msra.mxu0 0.0
        %404 = vmatprep.subr.mxu0 0.0
        %405 = vmatpush1.xpose.msra.mxu0 0.0
        %406 = vmatprep.subr.mxu0 0.0
        %407 = vmatpush1.xpose.msra.mxu0 0.0
        %408 = vmatprep.subr.mxu0 0.0
        %409 = vmatpush1.xpose.msra.mxu0 0.0
        %410 = vmatprep.subr.mxu0 0.0
        %411 = vmatpush1.xpose.msra.mxu0 0.0
        %412 = vmatprep.subr.mxu0 0.0
        %413 = vmatpush1.xpose.msra.mxu0 0.0
        %414 = vmatprep.subr.mxu0 0.0
        %415 = vmatpush1.xpose.msra.mxu0 0.0
        %416 = vmatprep.subr.mxu0 0.0
        %417 = vmatpush1.xpose.msra.mxu0 0.0
        %418 = vmatprep.subr.mxu0 0.0
        %419 = vmatpush1.xpose.msra.mxu0 0.0
        %420 = vmatprep.subr.mxu0 0.0
        %421 = vmatpush1.xpose.msra.mxu0 0.0
        %422 = vmatprep.subr.mxu0 0.0
        %423 = vmatpush1.xpose.msra.mxu0 0.0
        %424 = vmatprep.subr.mxu0 0.0
        %425 = vmatpush1.xpose.msra.mxu0 %v392
        %426 = vmatprep.subr.mxu0 0.0
        %427 = vmatpush2.xpose.msra.mxu0 0.0
        %428 = vmatprep.subr.mxu0 0.0
        %429 = vmatpush2.xpose.msra.mxu0 0.0
        %430 = vmatprep.subr.mxu0 0.0
        %431 = vmatpush2.xpose.msra.mxu0 0.0
        %432 = vmatprep.subr.mxu0 0.0
        %433 = vmatpush2.xpose.msra.mxu0 0.0
        %434 = vmatprep.subr.mxu0 0.0
        %435 = vmatpush2.xpose.msra.mxu0 0.0
        %436 = vmatprep.subr.mxu0 0.0
        %437 = vmatpush2.xpose.msra.mxu0 0.0
        %438 = vmatprep.subr.mxu0 0.0
        %439 = vmatpush2.xpose.msra.mxu0 0.0
        %440 = vmatprep.subr.mxu0 0.0
        %441 = vmatpush2.xpose.msra.mxu0 0.0
        %442 = vmatprep.subr.mxu0 0.0
        %443 = vmatpush2.xpose.msra.mxu0 0.0
        %444 = vmatprep.subr.mxu0 0.0
        %445 = vmatpush2.xpose.msra.mxu0 0.0
        %446 = vmatprep.subr.mxu0 0.0
        %447 = vmatpush2.xpose.msra.mxu0 0.0
        %448 = vmatprep.subr.mxu0 0.0
        %449 = vmatpush2.xpose.msra.mxu0 0.0
        %450 = vmatprep.subr.mxu0 0.0
        %451 = vmatpush2.xpose.msra.mxu0 0.0
        %452 = vmatprep.subr.mxu0 0.0
        %453 = vmatpush2.xpose.msra.mxu0 0.0
        %454 = vmatprep.subr.mxu0 0.0
        %455 = vmatpush2.xpose.msra.mxu0 0.0
        %456 = vmatprep.subr.mxu0 0.0
        %457 = vmatpush2.xpose.msra.mxu0 0.0
        %458 = vmatprep.mubr.f32.mxu0 0.0
        %459 = vmatmul.mubr.f32.gmra.mxu0 %v389
        %v460 = vpop.f32.mrf.mxu0
        %v461 = vadd.f32 0.0, %v460
        %v462 = vpop.f32.mrf.mxu0
        %463 = vdwg.mxu0
        %v464 = vld [vmem:[%s373] sm:$0x3]
        %v465 = vunpack.c.0.s8 %v464
        %vm466 = vcmp.ne.s32.totalorder %v465, 0
        %v467 = vsel %vm466, -2.3819763e+38, %v461
        %v468 = vld [vmem:[#allocation2] sm:$0xff]
        %vm469 = vcmask 64512
        %v470 = vsel %vm469, %v467, -inf
        %471 = vmax.xlane.f32.xlu0 %v470
        %v472 = vpop.xlane.xlu0 %471
        %v473 = vmax.f32 %v468, %v472
        %v474 = vsub.f32 %v468, %v473
        %v475 = vmul.f32 %v474, 1.442695
        %v476 = vpow.pop %v475
        %478 = vset.pattern.permute.xlu0 0
        %479 = vperm.xlu0 %478, %v473
        %v480 = vpop.permute.xlu0 %479
        %v482 = vsub.f32 %v467, %v480
        %v483 = vmul.f32 %v482, 1.442695
        %v484 = vpow.pop %v483
        %v485 = vld [vmem:[#allocation3] sm:$0xff]
        %v486 = vmul.f32 %v476, %v485
        %v487 = vsel %vm469, %v484, 0.0
        %488 = vadd.xlane.f32.xlu0 %v487
        %v489 = vpop.xlane.xlu0 %488
        %v490 = vadd.f32 %v486, %v489
        %vm491 = vcmask 7168
        %492 = vst.msk [vmem:[#allocation3] sm:$0xff] %vm491, %v490
        %v493 = vld [vmem:[#allocation4] sm:$0xff]
        %495 = vset.pattern.permute.xlu0 0
        %496 = vperm.xlu0 %495, %v476
        %v497 = vpop.permute.xlu0 %496
        %v499 = vmul.f32 %v497, %v493
        %v501 = vsel %vm469, %v484, 0
        %503 = vmatprep.subr.mxu0 0.0
        %504 = vmatpush1.msra.mxu0 0.0
        %505 = vmatprep.subr.mxu0 0.0
        %506 = vmatpush1.msra.mxu0 0.0
        %507 = vmatprep.subr.mxu0 0.0
        %508 = vmatpush1.msra.mxu0 0.0
        %509 = vmatprep.subr.mxu0 0.0
        %510 = vmatpush1.msra.mxu0 0.0
        %511 = vmatprep.subr.mxu0 0.0
        %512 = vmatpush1.msra.mxu0 0.0
        %513 = vmatprep.subr.mxu0 0.0
        %514 = vmatpush1.msra.mxu0 0.0
        %515 = vmatprep.subr.mxu0 0.0
        %516 = vmatpush1.msra.mxu0 0.0
        %517 = vmatprep.subr.mxu0 0.0
        %518 = vmatpush1.msra.mxu0 0.0
        %519 = vmatprep.subr.mxu0 0.0
        %520 = vmatpush1.msra.mxu0 0.0
        %521 = vmatprep.subr.mxu0 0.0
        %522 = vmatpush1.msra.mxu0 0.0
        %523 = vmatprep.subr.mxu0 0.0
        %524 = vmatpush1.msra.mxu0 0.0
        %525 = vmatprep.subr.mxu0 0.0
        %526 = vmatpush1.msra.mxu0 0.0
        %527 = vmatprep.subr.mxu0 0.0
        %528 = vmatpush1.msra.mxu0 0.0
        %529 = vmatprep.subr.mxu0 0.0
        %530 = vmatpush1.msra.mxu0 0.0
        %531 = vmatprep.subr.mxu0 0.0
        %532 = vmatpush1.msra.mxu0 0.0
        %533 = vmatprep.subr.mxu0 0.0
        %534 = vmatpush1.msra.mxu0 %v386
        %535 = vmatprep.subr.mxu0 0.0
        %536 = vmatpush2.msra.mxu0 0.0
        %537 = vmatprep.subr.mxu0 0.0
        %538 = vmatpush2.msra.mxu0 0.0
        %539 = vmatprep.subr.mxu0 0.0
        %540 = vmatpush2.msra.mxu0 0.0
        %541 = vmatprep.subr.mxu0 0.0
        %542 = vmatpush2.msra.mxu0 0.0
        %543 = vmatprep.subr.mxu0 0.0
        %544 = vmatpush2.msra.mxu0 0.0
        %545 = vmatprep.subr.mxu0 0.0
        %546 = vmatpush2.msra.mxu0 0.0
        %547 = vmatprep.subr.mxu0 0.0
        %548 = vmatpush2.msra.mxu0 0.0
        %549 = vmatprep.subr.mxu0 0.0
        %550 = vmatpush2.msra.mxu0 0.0
        %551 = vmatprep.subr.mxu0 0.0
        %552 = vmatpush2.msra.mxu0 0.0
        %553 = vmatprep.subr.mxu0 0.0
        %554 = vmatpush2.msra.mxu0 0.0
        %555 = vmatprep.subr.mxu0 0.0
        %556 = vmatpush2.msra.mxu0 0.0
        %557 = vmatprep.subr.mxu0 0.0
        %558 = vmatpush2.msra.mxu0 0.0
        %559 = vmatprep.subr.mxu0 0.0
        %560 = vmatpush2.msra.mxu0 0.0
        %561 = vmatprep.subr.mxu0 0.0
        %562 = vmatpush2.msra.mxu0 0.0
        %563 = vmatprep.subr.mxu0 0.0
        %564 = vmatpush2.msra.mxu0 0.0
        %565 = vmatprep.subr.mxu0 0.0
        %566 = vmatpush2.msra.mxu0 0.0
        %567 = vmatprep.mubr.f32.mxu0 0.0
        %568 = vmatmul.mubr.f32.gmra.mxu0 %v501
        %v569 = vpop.f32.mrf.mxu0
        %v570 = vadd.f32 0.0, %v569
        %v571 = vpop.f32.mrf.mxu0
        %572 = vdwg.mxu0
        %v573 = vadd.f32 %v499, %v570
        %574 = vst.msk [vmem:[#allocation4] sm:$0xff] %vm387, %v573
        %575 = vst.msk [vmem:[#allocation2] sm:$0xff] %vm491, %v473
        // Predicated region
        $region53: #{tpu_custom_call.1} parent=35 // pred_check
          %p576 = pneg %p374
        $region54: #{tpu_custom_call.1} parent=35 // pred_check_branch
          %578 = sbr.rel (%p576) target = $region56
        $region55: #{tpu_custom_call.1} parent=35 // pred_region
          %v579 = vld [vmem:[#allocation3] sm:$0xff]
          %v580 = vrcp.pop %v579
          %v581 = vmul.f32 %v579, %v580
          %v582 = vsub.f32 2.0, %v581
          %v583 = vmul.f32 %v580, %v582
          %v584 = vld [vmem:[#allocation4] sm:$0xff]
          %586 = vset.pattern.permute.xlu0 0
          %587 = vperm.xlu0 %586, %v583
          %v588 = vpop.permute.xlu0 %587
          %v590 = vmul.f32 %v584, %v588
          %591 = vst.msk [vmem:[%s363] sm:$0xff] %vm387, %v590
        $region56: #{tpu_custom_call.1} parent=35 // pred_fallthru
          _
        %s592 = sand.u32 %s182, 1
        %s593 = scalar_lea.sflag [#allocation7], %s592
        %s594 = sand.u32 %s182, 1
        %s595 = smul.addr %s594, 8
        %s596 = scalar_lea.vmem [#allocation11], %s595
        // Predicated region
        $region57: #{tpu_custom_call.1} parent=35 // pred_check
          %p597 = pneg %p192
        $region58: #{tpu_custom_call.1} parent=35 // pred_check_branch
          %599 = sbr.rel (%p597) target = $region60
        $region59: #{tpu_custom_call.1} parent=35 // pred_region
          %s601 = ssub.s32 128, 128
          %602 = vsyncadd %s593, %s601
          %s603 = sadd.s32 %s32, %s31
          %s604 = smul.addr %s30, 4
          %s605 = sadd.s32 %s603, %s604
          %s606 = smul.addr %s605, 128
          %s607 = scalar_lea.hbm %s4, %s606
          %s609 = sshll.u32 %s596, 4
          %s610 = int_to_ptr.vmem [resolvable:$true] %s609
          %612 = dma.vmem_to_hbm [thread:$0]  %s610, 128, %s607, %s593
        $region60: #{tpu_custom_call.1} parent=35 // pred_fallthru
          _
      $region36: #{tpu_custom_call.1} parent=5 // pred_fallthru
        _
      %p613 = scmp.le.s32.totalorder 2, %s19
      // Predicated region
      $region61: #{tpu_custom_call.1} parent=5 // pred_check
        %p614 = pneg %p613
      $region62: #{tpu_custom_call.1} parent=5 // pred_check_branch
        %616 = sbr.rel (%p614) target = $region64
      $region63: #{tpu_custom_call.1} parent=5 // pred_region
        %s617 = ssub.s32 %s19, 2
        // Predicated region
        $region65: #{tpu_custom_call.1} parent=63 // pred_check
          %p618 = pneg %p198
        $region66: #{tpu_custom_call.1} parent=63 // pred_check_branch
          %620 = sbr.rel (%p618) target = $region68
        $region67: #{tpu_custom_call.1} parent=63 // pred_region
          %s621 = sand.u32 %s183, 1
          %s622 = scalar_lea.sflag [#allocation7], %s621
          %s623 = sand.u32 %s183, 1
          %s624 = smul.addr %s623, 8
          %s625 = scalar_lea.vmem [#allocation11], %s624
          %626 = dma.done %s622, 128
        $region68: #{tpu_custom_call.1} parent=63 // pred_fallthru
          _
      $region64: #{tpu_custom_call.1} parent=5 // pred_fallthru
        _
    $region6: #{tpu_custom_call.1} parent=1 // loop_footer
      %s23 = sadd.s32 1, %s19
    $region7: #{tpu_custom_call.1} parent=1 // loop_footer_branch
      %18 = sbr.rel target = $region3
    $region8: #{tpu_custom_call.1} parent=1 // loop_exit
      _
    %627 = vsyncpa [#allocation6], 1
    %s628 = scalar_lea.sflag [#allocation6], 1
    %629 = vsyncpa %s628, 1
    %630 = vsyncpa [#allocation9], 1
    %s631 = scalar_lea.sflag [#allocation9], 1
    %632 = vsyncpa %s631, 1
    %633 = vsyncpa [#allocation7], 1
    %s634 = scalar_lea.sflag [#allocation7], 1
    %635 = vsyncpa %s634, 1

</llo_original>
